<compile_context>
chip_gen: v7x
topology: tpu7x:2x2x1
jax: 0.10.0
libtpu: 0.0.40
codegen_flags: <defaults>
</compile_context>

<pallas_src>
import jax
import jax.numpy as jnp
from jax.experimental import pallas as pl
from jax.experimental.pallas import tpu as pltpu


def _round_up(x: int, m: int) -> int:
    return ((x + m - 1) // m) * m


def two_linear_kernel_fused(x_ref, w1_ref, b1_ref, w2_ref, b2_ref, o_ref):
    # h = x @ W1 + b1  (f32 MXU accumulation) — kept as a value, no VMEM store.
    h = jnp.dot(x_ref[...], w1_ref[...], preferred_element_type=jnp.float32)
    h = (h + b1_ref[...]).astype(w2_ref.dtype)
    # y = h @ W2 + b2
    y = jnp.dot(h, w2_ref[...], preferred_element_type=jnp.float32)
    o_ref[...] = (y + b2_ref[...]).astype(o_ref.dtype)


def two_linear_kernel_scratch(x_ref, w1_ref, b1_ref, w2_ref, b2_ref, o_ref, h_ref):
    # Large-tile path: stage h in VMEM so it does not spill the vreg file.
    h = jnp.dot(x_ref[...], w1_ref[...], preferred_element_type=jnp.float32)
    h_ref[...] = (h + b1_ref[...]).astype(h_ref.dtype)
    y = jnp.dot(h_ref[...], w2_ref[...], preferred_element_type=jnp.float32)
    o_ref[...] = (y + b2_ref[...]).astype(o_ref.dtype)


def two_linear(x, w1, b1, w2, b2, *, tile_m=None, compute_dtype=None):
    """Fused forward: (x @ w1 + b1) @ w2 + b2.

    x  : [B, D]
    w1 : [D, D]   b1 : [D]    (weights stored [in, out], transpose of torch layout)
    w2 : [D, C]   b2 : [C]
    returns [B, C] in x.dtype

    compute_dtype=jnp.bfloat16 is the intended fast path on v6e/v7x (bf16 MXU,
    f32 accumulation).  Default (None) keeps exact input-dtype numerics.
    """
    B, D = x.shape
    C = w2.shape[1]
    out_dtype = x.dtype
    in_dtype = jnp.dtype(compute_dtype) if compute_dtype is not None else x.dtype

    # Lane-dense padding targets for the feature dims (skipped when already aligned).
    Dp = _round_up(D, 128)
    Cp = _round_up(C, 128)

    # Batch tile: cap 512, sublane-aligned, and leave >= 2 grid steps when the
    # batch allows it so both v7x TensorCores get work.
    if tile_m is None:
        tile_m = min(512, _round_up(max(B // 2, 1), 8), _round_up(B, 8))
    tile_m = max(8, _round_up(tile_m, 8))
    n_steps = pl.cdiv(B, tile_m)

    def maybe_pad2(a, rows, cols, dtype):
        # Early-out: no HBM copy when no padding and no cast is needed.
        if a.shape == (rows, cols) and a.dtype == dtype:
            return a
        a = a.astype(dtype)
        return jnp.pad(a, ((0, rows - a.shape[0]), (0, cols - a.shape[1])))

    x_p = maybe_pad2(x, B, Dp, in_dtype)                       # batch NOT padded
    w1_p = maybe_pad2(w1, Dp, Dp, in_dtype)
    w2_p = maybe_pad2(w2, Dp, Cp, in_dtype)
    b1_p = maybe_pad2(b1.reshape(1, D), 1, Dp, jnp.float32)
    b2_p = maybe_pad2(b2.reshape(1, C), 1, Cp, jnp.float32)

    isz = jnp.dtype(in_dtype).itemsize
    osz = jnp.dtype(out_dtype).itemsize

    # Skip the h scratch when the tile comfortably fits in registers (~128 KB).
    use_scratch = tile_m * Dp * isz > 128 * 1024
    if use_scratch:
        kernel = two_linear_kernel_scratch
        scratch_shapes = [pltpu.VMEM((tile_m, Dp), in_dtype)]
    else:
        kernel = two_linear_kernel_fused
        scratch_shapes = []

    # VMEM budget: double-buffered x/out tiles, single-buffered resident
    # weights/biases, optional h scratch; x2 headroom; clamped at 48 MiB so it
    # stays inside v7x's 64 MiB per-core VMEM.
    est = (
        2 * tile_m * Dp * isz                 # x tile (2 bufs)
        + 2 * tile_m * Cp * osz               # out tile (2 bufs)
        + (Dp * Dp + Dp * Cp) * isz           # weights (1 buf each)
        + (Dp + Cp) * 4                       # biases (f32)
        + (tile_m * Dp * isz if use_scratch else 0)
    )
    vmem_limit = int(min(48 * 2**20, max(16 * 2**20, 2 * est)))

    # Advisory cost estimate so XLA can schedule surrounding ops around the kernel.
    cost = pl.CostEstimate(
        flops=2 * B * Dp * (Dp + Cp),
        transcendentals=0,
        bytes_accessed=int(B * Dp * isz + (Dp * Dp + Dp * Cp) * isz
                           + (Dp + Cp) * 4 + B * Cp * osz),
    )

    resident = pl.Buffered(1)  # constant index_map -> never re-fetched

    out = pl.pallas_call(
        kernel,
        out_shape=jax.ShapeDtypeStruct((B, Cp), out_dtype),
        grid=(n_steps,),
        in_specs=[
            pl.BlockSpec((tile_m, Dp), lambda i: (i, 0)),                      # x
            pl.BlockSpec((Dp, Dp), lambda i: (0, 0), pipeline_mode=resident),  # w1
            pl.BlockSpec((1, Dp), lambda i: (0, 0), pipeline_mode=resident),   # b1
            pl.BlockSpec((Dp, Cp), lambda i: (0, 0), pipeline_mode=resident),  # w2
            pl.BlockSpec((1, Cp), lambda i: (0, 0), pipeline_mode=resident),   # b2
        ],
        out_specs=pl.BlockSpec((tile_m, Cp), lambda i: (i, 0)),
        scratch_shapes=scratch_shapes,
        compiler_params=pltpu.CompilerParams(
            dimension_semantics=("parallel",),
            vmem_limit_bytes=vmem_limit,
        ),
        cost_estimate=cost,
    )(x_p, w1_p, b1_p, w2_p, b2_p)

    return out if Cp == C else out[:, :C]


if __name__ == "__main__":
    # Small shapes consistent with TwoLinear(dim, num_class).
    batch, dim, num_class = 8, 32, 16

    key = jax.random.PRNGKey(0)
    kx, kw1, kb1, kw2, kb2 = jax.random.split(key, 5)

    x = jax.random.normal(kx, (batch, dim), dtype=jnp.float32)

    # Deterministic "nn.Linear"-style init (uniform in +-1/sqrt(fan_in)).
    bound = 1.0 / jnp.sqrt(dim)
    w1 = jax.random.uniform(kw1, (dim, dim), jnp.float32, -bound, bound)
    b1 = jax.random.uniform(kb1, (dim,), jnp.float32, -bound, bound)
    w2 = jax.random.uniform(kw2, (dim, num_class), jnp.float32, -bound, bound)
    b2 = jax.random.uniform(kb2, (dim,)[:0] + (num_class,), jnp.float32, -bound, bound)

    # Plain-JAX reference (same math as the PyTorch forward).
    y_ref = (x @ w1 + b1) @ w2 + b2

    # 1) f32 path, small batch (single/few tiles, fused no-scratch kernel).
    y = jax.block_until_ready(two_linear(x, w1, b1, w2, b2))
    assert y.shape == (batch, num_class)
    assert jnp.allclose(y, y_ref, atol=1e-4, rtol=1e-4)

    # 2) Multi-tile grid with a ragged last tile (B=28 not a multiple of TM=8):
    #    exercises the no-batch-padding path and OOB-masked writes.
    xb = jnp.tile(x, (4, 1))[:28]
    yb = jax.block_until_ready(two_linear(xb, w1, b1, w2, b2, tile_m=8))
    assert yb.shape == (28, num_class)
    assert jnp.allclose(yb, jnp.tile(y_ref, (4, 1))[:28], atol=1e-4, rtol=1e-4)

    # 3) bf16 compute path (v6e/v7x MXU fast path), f32 accumulation.
    y_bf16 = jax.block_until_ready(
        two_linear(x, w1, b1, w2, b2, compute_dtype=jnp.bfloat16))
    assert jnp.allclose(y_bf16, y_ref, atol=5e-2, rtol=5e-2)

    # 4) Larger tile (TM=128, D=384): exercises the VMEM-scratch kernel variant.
    dim2 = 384
    kx2, kw12, kb12, kw22, kb22 = jax.random.split(jax.random.PRNGKey(1), 5)
    x2 = jax.random.normal(kx2, (128, dim2), dtype=jnp.float32)
    bound2 = 1.0 / jnp.sqrt(dim2)
    w1_2 = jax.random.uniform(kw12, (dim2, dim2), jnp.float32, -bound2, bound2)
    b1_2 = jax.random.uniform(kb12, (dim2,), jnp.float32, -bound2, bound2)
    w2_2 = jax.random.uniform(kw22, (dim2, num_class), jnp.float32, -bound2, bound2)
    b2_2 = jax.random.uniform(kb22, (num_class,), jnp.float32, -bound2, bound2)
    y2_ref = (x2 @ w1_2 + b1_2) @ w2_2 + b2_2
    y2 = jax.block_until_ready(two_linear(x2, w1_2, b1_2, w2_2, b2_2, tile_m=128))
    assert jnp.allclose(y2, y2_ref, atol=1e-3, rtol=1e-3)

    print("KERNEL_OK")
</pallas_src>

<mosaic_0001>
module attributes {stable_mosaic.version = 11 : i64} {
  func.func @two_linear_kernel_fused(%arg0: i32, %arg1: memref<8x128xf32, #tpu.memory_space<vmem>>, %arg2: memref<128x128xf32, #tpu.memory_space<vmem>>, %arg3: memref<1x128xf32, #tpu.memory_space<vmem>>, %arg4: memref<128x128xf32, #tpu.memory_space<vmem>>, %arg5: memref<1x128xf32, #tpu.memory_space<vmem>>, %arg6: memref<8x128xf32, #tpu.memory_space<vmem>>) attributes {dimension_semantics = [#tpu.dimension_semantics<parallel>], iteration_bounds = array<i64: 1>, scalar_prefetch = 0 : i64, scratch_operands = 0 : i64, tpu.core_type = #tpu.core_type<tc>, window_params = [{transform_indices = @transform_0, window_bounds = array<i64: 8, 128>}, {pipeline_mode = #tpu.pipeline_mode<synchronous>, transform_indices = @transform_1, window_bounds = array<i64: 128, 128>}, {pipeline_mode = #tpu.pipeline_mode<synchronous>, transform_indices = @transform_2, window_bounds = array<i64: 1, 128>}, {pipeline_mode = #tpu.pipeline_mode<synchronous>, transform_indices = @transform_3, window_bounds = array<i64: 128, 128>}, {pipeline_mode = #tpu.pipeline_mode<synchronous>, transform_indices = @transform_4, window_bounds = array<i64: 1, 128>}, {transform_indices = @transform_5, window_bounds = array<i64: 8, 128>}]} {
    %c0 = arith.constant 0 : index
    %c0_0 = arith.constant 0 : index
    %0 = vector.load %arg1[%c0, %c0_0] : memref<8x128xf32, #tpu.memory_space<vmem>>, vector<8x128xf32>
    %c0_1 = arith.constant 0 : index
    %c0_2 = arith.constant 0 : index
    %1 = vector.load %arg2[%c0_1, %c0_2] : memref<128x128xf32, #tpu.memory_space<vmem>>, vector<128x128xf32>
    %cst = arith.constant dense<0.000000e+00> : vector<8x128xf32>
    %2 = tpu.matmul %0, %1, %cst {dimension_numbers = #tpu.dot_dimension_numbers<[1], [0], [0], [1], [0, 0, 1, 1], [], []>} : vector<8x128xf32>, vector<128x128xf32>, vector<8x128xf32> -> vector<8x128xf32>
    %c0_3 = arith.constant 0 : index
    %c0_4 = arith.constant 0 : index
    %3 = vector.load %arg3[%c0_3, %c0_4] : memref<1x128xf32, #tpu.memory_space<vmem>>, vector<1x128xf32>
    %4 = vector.broadcast %3 : vector<1x128xf32> to vector<8x128xf32>
    %5 = arith.addf %2, %4 : vector<8x128xf32>
    %c0_5 = arith.constant 0 : index
    %c0_6 = arith.constant 0 : index
    %6 = vector.load %arg4[%c0_5, %c0_6] : memref<128x128xf32, #tpu.memory_space<vmem>>, vector<128x128xf32>
    %cst_7 = arith.constant dense<0.000000e+00> : vector<8x128xf32>
    %7 = tpu.matmul %5, %6, %cst_7 {dimension_numbers = #tpu.dot_dimension_numbers<[1], [0], [0], [1], [0, 0, 1, 1], [], []>} : vector<8x128xf32>, vector<128x128xf32>, vector<8x128xf32> -> vector<8x128xf32>
    %c0_8 = arith.constant 0 : index
    %c0_9 = arith.constant 0 : index
    %8 = vector.load %arg5[%c0_8, %c0_9] : memref<1x128xf32, #tpu.memory_space<vmem>>, vector<1x128xf32>
    %9 = vector.broadcast %8 : vector<1x128xf32> to vector<8x128xf32>
    %10 = arith.addf %7, %9 : vector<8x128xf32>
    %c0_10 = arith.constant 0 : index
    %c0_11 = arith.constant 0 : index
    %11 = vector.load %arg6[%c0_10, %c0_11] : memref<8x128xf32, #tpu.memory_space<vmem>>, vector<8x128xf32>
    tpu.vector_store %arg6[%c0_10, %c0_11], %10 {strides = array<i32>} : memref<8x128xf32, #tpu.memory_space<vmem>>, vector<8x128xf32>,
    return
  }
  func.func @transform_0(%arg0: i32) -> (i32, i32) {
    %c0_i32 = arith.constant 0 : i32
    %c0_i32_0 = arith.constant 0 : i32
    return %arg0, %c0_i32 : i32, i32
  }
  func.func @transform_1(%arg0: i32) -> (i32, i32) {
    %c0_i32 = arith.constant 0 : i32
    %c0_i32_0 = arith.constant 0 : i32
    %c0_i32_1 = arith.constant 0 : i32
    return %c0_i32, %c0_i32_0 : i32, i32
  }
  func.func @transform_2(%arg0: i32) -> (i32, i32) {
    %c0_i32 = arith.constant 0 : i32
    %c0_i32_0 = arith.constant 0 : i32
    %c0_i32_1 = arith.constant 0 : i32
    return %c0_i32, %c0_i32_0 : i32, i32
  }
  func.func @transform_3(%arg0: i32) -> (i32, i32) {
    %c0_i32 = arith.constant 0 : i32
    %c0_i32_0 = arith.constant 0 : i32
    %c0_i32_1 = arith.constant 0 : i32
    return %c0_i32, %c0_i32_0 : i32, i32
  }
  func.func @transform_4(%arg0: i32) -> (i32, i32) {
    %c0_i32 = arith.constant 0 : i32
    %c0_i32_0 = arith.constant 0 : i32
    %c0_i32_1 = arith.constant 0 : i32
    return %c0_i32, %c0_i32_0 : i32, i32
  }
  func.func @transform_5(%arg0: i32) -> (i32, i32) {
    %c0_i32 = arith.constant 0 : i32
    %c0_i32_0 = arith.constant 0 : i32
    return %arg0, %c0_i32 : i32, i32
  }
}

</mosaic_0001>

<llo_original>
// kernel: tpu_custom_call.1
$region0: #{tpu_custom_call.1}
  #allocation0 [shape = 'u32[]', space=smem, size = 0x4, offset = 0x4, fixed_abs, tag = 'smem constant byte address 0x4 - core index']
  #allocation1 [shape = 'u32[144,128]{1,0:T(1,128)}', space=vmem, size = 0x12000, scoped, tag = 'internal scratch']
  %s0 = inlined_call_operand.hbm [shape: f32[8,128], index: 0, kind: input, shape index: {}]
  %s1 = inlined_call_operand.hbm [shape: f32[128,128], index: 1, kind: input, shape index: {}]
  %s2 = inlined_call_operand.vmem [shape: f32[1,128], index: 2, kind: input, shape index: {}]
  %s3 = inlined_call_operand.hbm [shape: f32[128,128], index: 3, kind: input, shape index: {}]
  %s4 = inlined_call_operand.vmem [shape: f32[1,128], index: 4, kind: input, shape index: {}]
  %s5 = inlined_call_operand.hbm [shape: f32[8,128], index: 5, kind: output, shape index: {}]
  %s6 = sld [smem:[#allocation0]]
  $region42: #{tpu_custom_call.1} parent=0
    _
  %s8 = ssub.s32 1, %s6
  %s9 = scalar_select 0, %s8, %s6
  $region1: #{tpu_custom_call.1} parent=0
    #allocation2 [shape = 'u8[4096]{0}', space=vmem, size = 0x1000, scoped, tag = 'input window, operand 0, single buffered']
    #allocation3 [shape = 's32[1]{0}', space=sflag, size = 0x4, scoped, tag = 'scoped memory for tpu_custom_call.1']
    #allocation4 [shape = 's32[1]{0}', space=sflag, size = 0x4, scoped, tag = 'scoped memory for tpu_custom_call.1']
    #allocation5 [shape = 'u8[65536]{0}', space=vmem, size = 0x10000, scoped, tag = 'input window, operand 1, single buffered']
    #allocation6 [shape = 's32[1]{0}', space=sflag, size = 0x4, scoped, tag = 'scoped memory for tpu_custom_call.1']
    #allocation7 [shape = 'u8[65536]{0}', space=vmem, size = 0x10000, scoped, tag = 'input window, operand 3, single buffered']
    #allocation8 [shape = 'u8[4096]{0}', space=vmem, size = 0x1000, scoped, tag = 'output window, operand 0, single buffered']
    %10 = vsyncpa [#allocation3], 0
    %11 = vsyncpa [#allocation6], 0
    %12 = vsyncpa [#allocation4], 0
    // Predicated region
    $region2: #{tpu_custom_call.1} parent=1 // pred_check
      _
    $region3: #{tpu_custom_call.1} parent=1 // pred_check_branch
      %14 = sbr.rel (0) target = $region5
    $region4: #{tpu_custom_call.1} parent=1 // pred_region
      %s16 = ssub.s32 128, 128
      %17 = vsyncadd [#allocation3], %s16
      %s19 = sshll.u32 [#allocation2], 4
      %s20 = int_to_ptr.vmem [resolvable:$true] %s19
      %22 = dma.hbm_to_vmem [thread:$0]  %s0, 128, %s20, [#allocation3]
    $region5: #{tpu_custom_call.1} parent=1 // pred_fallthru
      _
    // Predicated region
    $region6: #{tpu_custom_call.1} parent=1 // pred_check
      _
    $region7: #{tpu_custom_call.1} parent=1 // pred_check_branch
      %24 = sbr.rel (0) target = $region9
    $region8: #{tpu_custom_call.1} parent=1 // pred_region
      %s26 = ssub.s32 2048, 2048
      %27 = vsyncadd [#allocation6], %s26
      %s28 = sshll.u32 [#allocation5], 4
      %s29 = int_to_ptr.vmem [resolvable:$true] %s28
      %34 = dma.hbm_to_vmem [thread:$0]  %s1, 2048, %s29, [#allocation6], 128, 128, 8
    $region9: #{tpu_custom_call.1} parent=1 // pred_fallthru
      _
    // Predicated region
    $region10: #{tpu_custom_call.1} parent=1 // pred_check
      _
    $region11: #{tpu_custom_call.1} parent=1 // pred_check_branch
      %36 = sbr.rel (0) target = $region13
    $region12: #{tpu_custom_call.1} parent=1 // pred_region
      _
    $region13: #{tpu_custom_call.1} parent=1 // pred_fallthru
      _
    // Predicated region
    $region14: #{tpu_custom_call.1} parent=1 // pred_check
      _
    $region15: #{tpu_custom_call.1} parent=1 // pred_check_branch
      %38 = sbr.rel (0) target = $region17
    $region16: #{tpu_custom_call.1} parent=1 // pred_region
      %s40 = ssub.s32 2048, 2048
      %41 = vsyncadd [#allocation6], %s40
      %s42 = sshll.u32 [#allocation7], 4
      %s43 = int_to_ptr.vmem [resolvable:$true] %s42
      %48 = dma.hbm_to_vmem [thread:$0]  %s3, 2048, %s43, [#allocation6], 128, 128, 8
    $region17: #{tpu_custom_call.1} parent=1 // pred_fallthru
      _
    // Predicated region
    $region18: #{tpu_custom_call.1} parent=1 // pred_check
      _
    $region19: #{tpu_custom_call.1} parent=1 // pred_check_branch
      %50 = sbr.rel (0) target = $region21
    $region20: #{tpu_custom_call.1} parent=1 // pred_region
      _
    $region21: #{tpu_custom_call.1} parent=1 // pred_fallthru
      _
    // Predicated region
    $region22: #{tpu_custom_call.1} parent=1 // pred_check
      _
    $region23: #{tpu_custom_call.1} parent=1 // pred_check_branch
      %52 = sbr.rel (0) target = $region25
    $region24: #{tpu_custom_call.1} parent=1 // pred_region
      %53 = dma.done [#allocation3], 128
    $region25: #{tpu_custom_call.1} parent=1 // pred_fallthru
      _
    // Predicated region
    $region26: #{tpu_custom_call.1} parent=1 // pred_check
      _
    $region27: #{tpu_custom_call.1} parent=1 // pred_check_branch
      %55 = sbr.rel (0) target = $region29
    $region28: #{tpu_custom_call.1} parent=1 // pred_region
      %56 = dma.done [#allocation6], 2048
    $region29: #{tpu_custom_call.1} parent=1 // pred_fallthru
      _
    // Predicated region
    $region30: #{tpu_custom_call.1} parent=1 // pred_check
      _
    $region31: #{tpu_custom_call.1} parent=1 // pred_check_branch
      %58 = sbr.rel (0) target = $region33
    $region32: #{tpu_custom_call.1} parent=1 // pred_region
      %59 = dma.done [#allocation6], 2048
    $region33: #{tpu_custom_call.1} parent=1 // pred_fallthru
      _
    %v60 = vld [vmem:[#allocation2] sm:$0xff]
    %v61 = vld [vmem:[#allocation5] sm:$0xff]
    %v62 = vld [vmem:[#allocation5 + $0x8] sm:$0xff]
    %v63 = vld [vmem:[#allocation5 + $0x10] sm:$0xff]
    %v64 = vld [vmem:[#allocation5 + $0x18] sm:$0xff]
    %v65 = vld [vmem:[#allocation5 + $0x20] sm:$0xff]
    %v66 = vld [vmem:[#allocation5 + $0x28] sm:$0xff]
    %v67 = vld [vmem:[#allocation5 + $0x30] sm:$0xff]
    %v68 = vld [vmem:[#allocation5 + $0x38] sm:$0xff]
    %v69 = vld [vmem:[#allocation5 + $0x40] sm:$0xff]
    %v70 = vld [vmem:[#allocation5 + $0x48] sm:$0xff]
    %v71 = vld [vmem:[#allocation5 + $0x50] sm:$0xff]
    %v72 = vld [vmem:[#allocation5 + $0x58] sm:$0xff]
    %v73 = vld [vmem:[#allocation5 + $0x60] sm:$0xff]
    %v74 = vld [vmem:[#allocation5 + $0x68] sm:$0xff]
    %v75 = vld [vmem:[#allocation5 + $0x70] sm:$0xff]
    %v76 = vld [vmem:[#allocation5 + $0x78] sm:$0xff]
    %v77 = vld [vmem:[%s2] sm:$0x1]
    %v79 = vlaneseq
    %v80 = vshrl.u32 %v79, 7
    %v81 = vsub.s32 0, %v80
    %v82 = vrot.slane %v77, %v81
    %84 = vmatprep.subr.mxu0 0.0
    %85 = vmatpush1.msra.mxu0 %v61
    %86 = vmatprep.subr.mxu0 0.0
    %87 = vmatpush1.msra.mxu0 %v62
    %88 = vmatprep.subr.mxu0 0.0
    %89 = vmatpush1.msra.mxu0 %v63
    %90 = vmatprep.subr.mxu0 0.0
    %91 = vmatpush1.msra.mxu0 %v64
    %92 = vmatprep.subr.mxu0 0.0
    %93 = vmatpush1.msra.mxu0 %v65
    %94 = vmatprep.subr.mxu0 0.0
    %95 = vmatpush1.msra.mxu0 %v66
    %96 = vmatprep.subr.mxu0 0.0
    %97 = vmatpush1.msra.mxu0 %v67
    %98 = vmatprep.subr.mxu0 0.0
    %99 = vmatpush1.msra.mxu0 %v68
    %100 = vmatprep.subr.mxu0 0.0
    %101 = vmatpush1.msra.mxu0 %v69
    %102 = vmatprep.subr.mxu0 0.0
    %103 = vmatpush1.msra.mxu0 %v70
    %104 = vmatprep.subr.mxu0 0.0
    %105 = vmatpush1.msra.mxu0 %v71
    %106 = vmatprep.subr.mxu0 0.0
    %107 = vmatpush1.msra.mxu0 %v72
    %108 = vmatprep.subr.mxu0 0.0
    %109 = vmatpush1.msra.mxu0 %v73
    %110 = vmatprep.subr.mxu0 0.0
    %111 = vmatpush1.msra.mxu0 %v74
    %112 = vmatprep.subr.mxu0 0.0
    %113 = vmatpush1.msra.mxu0 %v75
    %114 = vmatprep.subr.mxu0 0.0
    %115 = vmatpush1.msra.mxu0 %v76
    %116 = vmatprep.subr.mxu0 0.0
    %117 = vmatpush1.msra.mxu0 0.0
    %118 = vmatprep.subr.mxu0 0.0
    %119 = vmatpush1.msra.mxu0 0.0
    %120 = vmatprep.subr.mxu0 0.0
    %121 = vmatpush1.msra.mxu0 0.0
    %122 = vmatprep.subr.mxu0 0.0
    %123 = vmatpush1.msra.mxu0 0.0
    %124 = vmatprep.subr.mxu0 0.0
    %125 = vmatpush1.msra.mxu0 0.0
    %126 = vmatprep.subr.mxu0 0.0
    %127 = vmatpush1.msra.mxu0 0.0
    %128 = vmatprep.subr.mxu0 0.0
    %129 = vmatpush1.msra.mxu0 0.0
    %130 = vmatprep.subr.mxu0 0.0
    %131 = vmatpush1.msra.mxu0 0.0
    %132 = vmatprep.subr.mxu0 0.0
    %133 = vmatpush1.msra.mxu0 0.0
    %134 = vmatprep.subr.mxu0 0.0
    %135 = vmatpush1.msra.mxu0 0.0
    %136 = vmatprep.subr.mxu0 0.0
    %137 = vmatpush1.msra.mxu0 0.0
    %138 = vmatprep.subr.mxu0 0.0
    %139 = vmatpush1.msra.mxu0 0.0
    %140 = vmatprep.subr.mxu0 0.0
    %141 = vmatpush1.msra.mxu0 0.0
    %142 = vmatprep.subr.mxu0 0.0
    %143 = vmatpush1.msra.mxu0 0.0
    %144 = vmatprep.subr.mxu0 0.0
    %145 = vmatpush1.msra.mxu0 0.0
    %146 = vmatprep.subr.mxu0 0.0
    %147 = vmatpush1.msra.mxu0 0.0
    %148 = vmatprep.mubr.f32.mxu0 0.0
    %149 = vmatmul.mubr.f32.gmra.mrb[0].mxu0 %v60
    %v150 = vpop.f32.mrb[0].mxu0
    %v151 = vadd.f32 %v82, %v150
    %v152 = vpop.f32.mrb[0].mxu0
    %153 = vdwg.mxu0
    %v154 = vld [vmem:[#allocation7] sm:$0xff]
    %v155 = vld [vmem:[#allocation7 + $0x8] sm:$0xff]
    %v156 = vld [vmem:[#allocation7 + $0x10] sm:$0xff]
    %v157 = vld [vmem:[#allocation7 + $0x18] sm:$0xff]
    %v158 = vld [vmem:[#allocation7 + $0x20] sm:$0xff]
    %v159 = vld [vmem:[#allocation7 + $0x28] sm:$0xff]
    %v160 = vld [vmem:[#allocation7 + $0x30] sm:$0xff]
    %v161 = vld [vmem:[#allocation7 + $0x38] sm:$0xff]
    %v162 = vld [vmem:[#allocation7 + $0x40] sm:$0xff]
    %v163 = vld [vmem:[#allocation7 + $0x48] sm:$0xff]
    %v164 = vld [vmem:[#allocation7 + $0x50] sm:$0xff]
    %v165 = vld [vmem:[#allocation7 + $0x58] sm:$0xff]
    %v166 = vld [vmem:[#allocation7 + $0x60] sm:$0xff]
    %v167 = vld [vmem:[#allocation7 + $0x68] sm:$0xff]
    %v168 = vld [vmem:[#allocation7 + $0x70] sm:$0xff]
    %v169 = vld [vmem:[#allocation7 + $0x78] sm:$0xff]
    %v170 = vld [vmem:[%s4] sm:$0x1]
    %v172 = vlaneseq
    %v173 = vshrl.u32 %v172, 7
    %v174 = vsub.s32 0, %v173
    %v175 = vrot.slane %v170, %v174
    %177 = vmatprep.subr.mxu0 0.0
    %178 = vmatpush1.msra.mxu0 %v154
    %179 = vmatprep.subr.mxu0 0.0
    %180 = vmatpush1.msra.mxu0 %v155
    %181 = vmatprep.subr.mxu0 0.0
    %182 = vmatpush1.msra.mxu0 %v156
    %183 = vmatprep.subr.mxu0 0.0
    %184 = vmatpush1.msra.mxu0 %v157
    %185 = vmatprep.subr.mxu0 0.0
    %186 = vmatpush1.msra.mxu0 %v158
    %187 = vmatprep.subr.mxu0 0.0
    %188 = vmatpush1.msra.mxu0 %v159
    %189 = vmatprep.subr.mxu0 0.0
    %190 = vmatpush1.msra.mxu0 %v160
    %191 = vmatprep.subr.mxu0 0.0
    %192 = vmatpush1.msra.mxu0 %v161
    %193 = vmatprep.subr.mxu0 0.0
    %194 = vmatpush1.msra.mxu0 %v162
    %195 = vmatprep.subr.mxu0 0.0
    %196 = vmatpush1.msra.mxu0 %v163
    %197 = vmatprep.subr.mxu0 0.0
    %198 = vmatpush1.msra.mxu0 %v164
    %199 = vmatprep.subr.mxu0 0.0
    %200 = vmatpush1.msra.mxu0 %v165
    %201 = vmatprep.subr.mxu0 0.0
    %202 = vmatpush1.msra.mxu0 %v166
    %203 = vmatprep.subr.mxu0 0.0
    %204 = vmatpush1.msra.mxu0 %v167
    %205 = vmatprep.subr.mxu0 0.0
    %206 = vmatpush1.msra.mxu0 %v168
    %207 = vmatprep.subr.mxu0 0.0
    %208 = vmatpush1.msra.mxu0 %v169
    %209 = vmatprep.subr.mxu0 0.0
    %210 = vmatpush1.msra.mxu0 0.0
    %211 = vmatprep.subr.mxu0 0.0
    %212 = vmatpush1.msra.mxu0 0.0
    %213 = vmatprep.subr.mxu0 0.0
    %214 = vmatpush1.msra.mxu0 0.0
    %215 = vmatprep.subr.mxu0 0.0
    %216 = vmatpush1.msra.mxu0 0.0
    %217 = vmatprep.subr.mxu0 0.0
    %218 = vmatpush1.msra.mxu0 0.0
    %219 = vmatprep.subr.mxu0 0.0
    %220 = vmatpush1.msra.mxu0 0.0
    %221 = vmatprep.subr.mxu0 0.0
    %222 = vmatpush1.msra.mxu0 0.0
    %223 = vmatprep.subr.mxu0 0.0
    %224 = vmatpush1.msra.mxu0 0.0
    %225 = vmatprep.subr.mxu0 0.0
    %226 = vmatpush1.msra.mxu0 0.0
    %227 = vmatprep.subr.mxu0 0.0
    %228 = vmatpush1.msra.mxu0 0.0
    %229 = vmatprep.subr.mxu0 0.0
    %230 = vmatpush1.msra.mxu0 0.0
    %231 = vmatprep.subr.mxu0 0.0
    %232 = vmatpush1.msra.mxu0 0.0
    %233 = vmatprep.subr.mxu0 0.0
    %234 = vmatpush1.msra.mxu0 0.0
    %235 = vmatprep.subr.mxu0 0.0
    %236 = vmatpush1.msra.mxu0 0.0
    %237 = vmatprep.subr.mxu0 0.0
    %238 = vmatpush1.msra.mxu0 0.0
    %239 = vmatprep.subr.mxu0 0.0
    %240 = vmatpush1.msra.mxu0 0.0
    %241 = vmatprep.mubr.f32.mxu0 0.0
    %242 = vmatmul.mubr.f32.gmra.mrb[0].mxu0 %v151
    %v243 = vpop.f32.mrb[0].mxu0
    %v244 = vadd.f32 %v175, %v243
    %v245 = vpop.f32.mrb[0].mxu0
    %246 = vdwg.mxu0
    %247 = vst [vmem:[#allocation8] sm:$0xff] %v244
    // Predicated region
    $region34: #{tpu_custom_call.1} parent=1 // pred_check
      _
    $region35: #{tpu_custom_call.1} parent=1 // pred_check_branch
      %249 = sbr.rel (0) target = $region37
    $region36: #{tpu_custom_call.1} parent=1 // pred_region
      %s251 = ssub.s32 128, 128
      %252 = vsyncadd [#allocation4], %s251
      %s254 = sshll.u32 [#allocation8], 4
      %s255 = int_to_ptr.vmem [resolvable:$true] %s254
      %257 = dma.vmem_to_hbm [thread:$0]  %s255, 128, %s5, [#allocation4]
    $region37: #{tpu_custom_call.1} parent=1 // pred_fallthru
      _
    // Predicated region
    $region38: #{tpu_custom_call.1} parent=1 // pred_check
      _
    $region39: #{tpu_custom_call.1} parent=1 // pred_check_branch
      %259 = sbr.rel (0) target = $region41
    $region40: #{tpu_custom_call.1} parent=1 // pred_region
      %260 = dma.done [#allocation4], 128
    $region41: #{tpu_custom_call.1} parent=1 // pred_fallthru
      _
    %261 = vsyncpa [#allocation3], 1
    %262 = vsyncpa [#allocation6], 1
    %263 = vsyncpa [#allocation4], 1

</llo_original>
